<compile_context>
chip_gen: v7x
topology: tpu7x:2x2x1
jax: 0.10.0
libtpu: 0.0.40
codegen_flags: <defaults>
</compile_context>

<pallas_src>
import functools

import jax
import jax.numpy as jnp
from jax.experimental import pallas as pl
from jax.experimental.pallas import tpu as pltpu


def _round_up(x, m):
    return ((x + m - 1) // m) * m


def _cdiv(a, b):
    return (a + b - 1) // b


def _num_tensorcores():
    """v7x has 2 TensorCores per chip; v5e/v6e have 1.

    The 2-way 'parallel' grid split is only worthwhile with 2 TCs; on 1-TC
    chips it just adds per-step overhead and (for odd block counts) a wasted
    clamped full-slab re-read.
    """
    try:
        kind = (getattr(jax.devices()[0], "device_kind", "") or "").lower()
        if "v7" in kind:
            return 2
    except Exception:
        pass
    return 1


def _masked_nll_kernel(x_ref, tgt_ref, mask_ref, loss_out_ref, msum_out_ref,
                       acc_ref, macc_ref, *, tile_n, steps_per_split, n_rows):
    """One grid step processes a (tile_n, V) slab of log-probs.

    Gathers the log-prob at the target index via a one-hot compare against a
    lane iota (kept in the native dtype — exact, <=1 nonzero per row), applies
    the mask, gates out-of-range (tail / clamped-overhang) rows with a select,
    and accumulates per-row loss and mask contributions into (tile_n, 1) f32
    scratch.  The scalar reduce + output write happens once per core, at the
    last inner step.
    """
    c = pl.program_id(0)   # megacore split index ("parallel")
    i = pl.program_id(1)   # inner row-block index ("arbitrary")

    @pl.when(i == 0)
    def _():
        acc_ref[...] = jnp.zeros_like(acc_ref)
        macc_ref[...] = jnp.zeros_like(macc_ref)

    x = x_ref[...]        # (tile_n, V), native dtype (bf16 or f32)
    tgt = tgt_ref[...]    # (tile_n, 1)  int32 target indices
    m = mask_ref[...]     # (tile_n, 1)  float32 mask

    col = jax.lax.broadcasted_iota(jnp.int32, x.shape, dimension=1)
    onehot = col == tgt                                         # (tile_n, V)
    # NOTE: out-of-range targets (e.g. -1 padding) match no lane and silently
    # contribute 0 — only matters if such rows can carry a nonzero mask.
    zero = jnp.zeros((), dtype=x.dtype)
    picked = jnp.sum(jnp.where(onehot, x, zero), axis=-1, keepdims=True)
    picked = picked.astype(jnp.float32)                         # (tile_n, 1)

    # Gate rows beyond N (partial / clamped tail blocks contain garbage HBM
    # data; a select — not a multiply — keeps NaN/Inf garbage out).
    lb = c * steps_per_split + i                                # logical block
    row = lb * tile_n + jax.lax.broadcasted_iota(jnp.int32, (tile_n, 1), 0)
    valid = row < n_rows
    acc_ref[...] = acc_ref[...] + jnp.where(valid, -picked * m, 0.0)
    macc_ref[...] = macc_ref[...] + jnp.where(valid, m, 0.0)

    @pl.when(i == steps_per_split - 1)
    def _():
        loss_out_ref[...] = jnp.sum(acc_ref[...]).reshape(1, 1, 1)
        msum_out_ref[...] = jnp.sum(macc_ref[...]).reshape(1, 1, 1)


def _select_tiling(n_rows, v, itemsize, num_cores):
    """Pick tile_n / vmem_limit from the actual chip's per-TC VMEM capacity."""
    try:
        vmem_cap = int(pltpu.get_tpu_info().vmem_capacity_bytes)
    except Exception:
        vmem_cap = 64 << 20  # conservative fallback (v7x per-TC size)

    # Defensive: if a 2-TC chip reports per-chip capacity, convert to per-TC.
    if num_cores >= 2 and vmem_cap > (64 << 20):
        vmem_cap //= num_cores

    # Scoped-limit ceiling, kept comfortably under physical per-TC capacity
    # so lane-padded tgt/mask buffers + compiler internals always fit.
    if num_cores >= 2:
        limit_ceiling = min(vmem_cap, 56 << 20)    # v7x: 64 MiB / TC physical
    else:
        limit_ceiling = min(vmem_cap, 100 << 20)   # v5e/v6e: 128 MiB physical
    headroom = 8 << 20                             # compiler internals
    usable = max(limit_ceiling - headroom, 8 << 20)

    bytes_per_row_x = v * itemsize
    # Per-row VMEM cost:
    #   x double-buffer                          : 2 * V * itemsize
    #   in-kernel (tile_n, V) temporaries        : ~16 B / vocab elem (iota,
    #     compare mask, selected values), conservative
    #   tgt + mask double-buffers (lane-padded)  : 2 arrays * 2 bufs * 128 * 4
    #   loss / mask f32 accumulators (lane-pad)  : 2 * 128 * 4
    per_row = (2 * bytes_per_row_x + 16 * v
               + 2 * 2 * 128 * 4 + 2 * 128 * 4)

    # Size the x block by bytes (~8 MiB target — within the 4-16 MiB band
    # that reaches the HBM roofline), bounded by the VMEM-fit constraint.
    target_block_bytes = 8 << 20
    tile_n = min(usable // per_row,
                 max(target_block_bytes // max(bytes_per_row_x, 1), 8))
    tile_n = min(tile_n, _round_up(n_rows, 8))
    tile_n = max(8, (tile_n // 8) * 8)

    need = tile_n * per_row + (1 << 20)
    vmem_limit = int(min(limit_ceiling, max(need + headroom, 32 << 20)))
    return tile_n, vmem_limit


@functools.partial(jax.jit, static_argnames=("max_tile_n",))
def _masked_nll_and_mask_sum(x, tgt, m, *, max_tile_n=None):
    """x: (N, V) log-probs (native dtype); tgt: (N, 1) int32; m: (N, 1) f32.

    Returns (sum_r -x[r, tgt[r]] * m[r],  sum_r m[r]) as float32 scalars.
    """
    n, v = x.shape
    num_cores = _num_tensorcores()
    tile_n, vmem_limit = _select_tiling(n, v, x.dtype.itemsize, num_cores)
    if max_tile_n is not None:  # testing hook to force multi-block paths
        tile_n = min(tile_n, max(8, (max_tile_n // 8) * 8))

    total_blocks = _cdiv(n, tile_n)
    # 2-way megacore split only when the chip actually has 2 TensorCores.
    num_splits = 2 if (num_cores >= 2 and total_blocks >= 2) else 1
    steps_per_split = _cdiv(total_blocks, num_splits)

    def row_block_map(c, i):
        # Clamp so over-hanging logical blocks re-read the last valid block;
        # the in-kernel `row < N` gate zeroes their contribution.
        lb = jnp.minimum(c * steps_per_split + i, total_blocks - 1)
        return (lb, 0)

    kernel = functools.partial(
        _masked_nll_kernel,
        tile_n=tile_n, steps_per_split=steps_per_split, n_rows=n)

    p_loss, p_mask = pl.pallas_call(
        kernel,
        grid=(num_splits, steps_per_split),
        in_specs=[
            pl.BlockSpec((tile_n, v), row_block_map),   # native-dtype log-probs
            pl.BlockSpec((tile_n, 1), row_block_map),   # targets
            pl.BlockSpec((tile_n, 1), row_block_map),   # mask
        ],
        out_specs=(
            pl.BlockSpec((1, 1, 1), lambda c, i: (c, 0, 0)),   # loss partials
            pl.BlockSpec((1, 1, 1), lambda c, i: (c, 0, 0)),   # mask partials
        ),
        out_shape=(
            jax.ShapeDtypeStruct((num_splits, 1, 1), jnp.float32),
            jax.ShapeDtypeStruct((num_splits, 1, 1), jnp.float32),
        ),
        scratch_shapes=[pltpu.VMEM((tile_n, 1), jnp.float32),
                        pltpu.VMEM((tile_n, 1), jnp.float32)],
        compiler_params=pltpu.CompilerParams(
            dimension_semantics=("parallel", "arbitrary"),
            vmem_limit_bytes=vmem_limit),
    )(x, tgt, m)
    return jnp.sum(p_loss), jnp.sum(p_mask)


def language_model_criterion_forward(_input, target, mask, *, max_tile_n=None):
    """Mirrors LanguageModelCriterion.forward for the empty-auxiliary path."""
    # Shape plumbing identical to the PyTorch module.
    if _input.ndim == 4:
        _input = _input.reshape(-1, _input.shape[-2], _input.shape[-1])
    if target.ndim == 3:
        target = target.reshape(-1, target.shape[2])
        mask = mask.reshape(-1, mask.shape[2])

    t_len = _input.shape[1]
    target = target[:, :t_len]
    mask = mask[:, :t_len]

    b, t, v = _input.shape
    n = b * t
    x = _input.reshape(n, v)                       # keep native dtype (no f32 copy)
    tgt = target.reshape(n, 1).astype(jnp.int32)
    m = mask.reshape(n, 1).astype(jnp.float32)

    loss_sum, mask_sum = _masked_nll_and_mask_sum(x, tgt, m,
                                                  max_tile_n=max_tile_n)
    # NOTE: all-zero mask yields NaN (division by zero), same as the PyTorch module.
    output = loss_sum / mask_sum
    return output, output, output, output


if __name__ == "__main__":
    key = jax.random.PRNGKey(0)
    k1, k2, k3, k4 = jax.random.split(key, 4)

    # Case 1: small f32 inputs, variable-length mask.
    B, T, V = 2, 8, 32
    logits = jax.random.normal(k1, (B, T, V), dtype=jnp.float32)
    _input = jax.nn.log_softmax(logits, axis=-1)          # log-probs
    target = jax.random.randint(k2, (B, T), 0, V, dtype=jnp.int32)
    mask = (jnp.arange(T)[None, :] < jnp.array([[6], [8]])).astype(jnp.float32)

    out = jax.block_until_ready(
        language_model_criterion_forward(_input, target, mask))
    gathered = jnp.take_along_axis(_input, target[..., None], axis=-1)[..., 0]
    ref = jnp.sum(-gathered * mask) / jnp.sum(mask)
    assert jnp.allclose(out[0], ref, rtol=1e-5, atol=1e-5), (out[0], ref)
    assert all(jnp.allclose(o, out[0]) for o in out)

    # Case 2: bf16 log-probs (native-dtype DMA + native-dtype select/reduce),
    # N not a multiple of 8 (exercises the partial tail-block gate).
    B2, T2, V2 = 3, 7, 256
    logits2 = jax.random.normal(k3, (B2, T2, V2), dtype=jnp.float32)
    _input2 = jax.nn.log_softmax(logits2, axis=-1).astype(jnp.bfloat16)
    target2 = jax.random.randint(k4, (B2, T2), 0, V2, dtype=jnp.int32)
    mask2 = (jnp.arange(T2)[None, :] < jnp.array([[5], [7], [3]])).astype(jnp.float32)

    out2 = jax.block_until_ready(
        language_model_criterion_forward(_input2, target2, mask2))
    g2 = jnp.take_along_axis(_input2.astype(jnp.float32),
                             target2[..., None], axis=-1)[..., 0]
    ref2 = jnp.sum(-g2 * mask2) / jnp.sum(mask2)
    assert jnp.allclose(out2[0], ref2, rtol=1e-4, atol=1e-4), (out2[0], ref2)

    # Case 3: force a tiny tile to exercise the multi-block grid, the clamped
    # over-hanging block path, and (on v7x) the 2-way megacore split.
    out3 = jax.block_until_ready(
        language_model_criterion_forward(_input2, target2, mask2, max_tile_n=8))
    assert jnp.allclose(out3[0], ref2, rtol=1e-4, atol=1e-4), (out3[0], ref2)

    print("KERNEL_OK")
</pallas_src>

<mosaic_0001>
module attributes {stable_mosaic.version = 11 : i64} {
  func.func @_masked_nll_kernel(%arg0: i32, %arg1: i32, %arg2: memref<16x32xf32, #tpu.memory_space<vmem>>, %arg3: memref<16x1xi32, #tpu.memory_space<vmem>>, %arg4: memref<16x1xf32, #tpu.memory_space<vmem>>, %arg5: memref<1x1x1xf32, #tpu.memory_space<vmem>>, %arg6: memref<1x1x1xf32, #tpu.memory_space<vmem>>, %arg7: memref<16x1xf32, #tpu.memory_space<vmem>>, %arg8: memref<16x1xf32, #tpu.memory_space<vmem>>) attributes {dimension_semantics = [#tpu.dimension_semantics<parallel>, #tpu.dimension_semantics<arbitrary>], iteration_bounds = array<i64: 1, 1>, scalar_prefetch = 0 : i64, scratch_operands = 2 : i64, tpu.core_type = #tpu.core_type<tc>, window_params = [{transform_indices = @transform_0, window_bounds = array<i64: 16, 32>}, {transform_indices = @transform_1, window_bounds = array<i64: 16, 1>}, {transform_indices = @transform_2, window_bounds = array<i64: 16, 1>}, {transform_indices = @transform_3, window_bounds = array<i64: 1, 1, 1>}, {transform_indices = @transform_4, window_bounds = array<i64: 1, 1, 1>}]} {
    %c0_i32 = arith.constant 0 : i32
    %0 = arith.cmpi eq, %arg1, %c0_i32 : i32
    %1 = arith.extui %0 : i1 to i32
    %c0_i32_0 = arith.constant 0 : i32
    %2 = arith.cmpi ne, %1, %c0_i32_0 : i32
    scf.if %2 {
      %cst_21 = arith.constant 0.000000e+00 : f32
      %37 = vector.broadcast %cst_21 : f32 to vector<16x1xf32>
      %c0_22 = arith.constant 0 : index
      %c0_23 = arith.constant 0 : index
      %38 = vector.load %arg7[%c0_22, %c0_23] : memref<16x1xf32, #tpu.memory_space<vmem>>, vector<16x1xf32>
      tpu.vector_store %arg7[%c0_22, %c0_23], %37 {strides = array<i32>} : memref<16x1xf32, #tpu.memory_space<vmem>>, vector<16x1xf32>,
      %cst_24 = arith.constant 0.000000e+00 : f32
      %39 = vector.broadcast %cst_24 : f32 to vector<16x1xf32>
      %c0_25 = arith.constant 0 : index
      %c0_26 = arith.constant 0 : index
      %40 = vector.load %arg8[%c0_25, %c0_26] : memref<16x1xf32, #tpu.memory_space<vmem>>, vector<16x1xf32>
      tpu.vector_store %arg8[%c0_25, %c0_26], %39 {strides = array<i32>} : memref<16x1xf32, #tpu.memory_space<vmem>>, vector<16x1xf32>,
    } else {
    }
    %c0 = arith.constant 0 : index
    %c0_1 = arith.constant 0 : index
    %3 = vector.load %arg2[%c0, %c0_1] : memref<16x32xf32, #tpu.memory_space<vmem>>, vector<16x32xf32>
    %c0_2 = arith.constant 0 : index
    %c0_3 = arith.constant 0 : index
    %4 = vector.load %arg3[%c0_2, %c0_3] : memref<16x1xi32, #tpu.memory_space<vmem>>, vector<16x1xi32>
    %c0_4 = arith.constant 0 : index
    %c0_5 = arith.constant 0 : index
    %5 = vector.load %arg4[%c0_4, %c0_5] : memref<16x1xf32, #tpu.memory_space<vmem>>, vector<16x1xf32>
    %6 = tpu.iota {dimensions = array<i32: 1>} : vector<16x32xi32>
    %7 = vector.broadcast %4 : vector<16x1xi32> to vector<16x32xi32>
    %8 = arith.cmpi eq, %6, %7 : vector<16x32xi32>
    %cst = arith.constant 0.000000e+00 : f32
    %9 = vector.broadcast %cst : f32 to vector<16x32xf32>
    %10 = arith.select %8, %3, %9 : vector<16x32xi1>, vector<16x32xf32>
    %cst_6 = arith.constant dense<0.000000e+00> : vector<16xf32>
    %11 = vector.multi_reduction <add>, %10, %cst_6 [1] : vector<16x32xf32> to vector<16xf32>
    %12 = vector.shape_cast %11 : vector<16xf32> to vector<16x1xf32>
    %c1_i32 = arith.constant 1 : i32
    %13 = arith.muli %arg0, %c1_i32 : i32
    %14 = arith.addi %13, %arg1 : i32
    %c16_i32 = arith.constant 16 : i32
    %15 = arith.muli %14, %c16_i32 : i32
    %16 = tpu.iota {dimensions = array<i32: 0>} : vector<16x1xi32>
    %17 = vector.broadcast %15 : i32 to vector<16x1xi32>
    %18 = arith.addi %17, %16 : vector<16x1xi32>
    %c16_i32_7 = arith.constant 16 : i32
    %19 = vector.broadcast %c16_i32_7 : i32 to vector<16x1xi32>
    %20 = arith.cmpi slt, %18, %19 : vector<16x1xi32>
    %c0_8 = arith.constant 0 : index
    %c0_9 = arith.constant 0 : index
    %21 = vector.load %arg7[%c0_8, %c0_9] : memref<16x1xf32, #tpu.memory_space<vmem>>, vector<16x1xf32>
    %cst_10 = arith.constant 0.000000e+00 : f32
    %22 = vector.broadcast %cst_10 : f32 to vector<16x1xf32>
    %23 = arith.subf %22, %12 : vector<16x1xf32>
    %24 = arith.mulf %23, %5 : vector<16x1xf32>
    %cst_11 = arith.constant 0.000000e+00 : f32
    %25 = vector.broadcast %cst_11 : f32 to vector<16x1xf32>
    %26 = arith.select %20, %24, %25 : vector<16x1xi1>, vector<16x1xf32>
    %27 = arith.addf %21, %26 : vector<16x1xf32>
    %c0_12 = arith.constant 0 : index
    %c0_13 = arith.constant 0 : index
    %28 = vector.load %arg7[%c0_12, %c0_13] : memref<16x1xf32, #tpu.memory_space<vmem>>, vector<16x1xf32>
    tpu.vector_store %arg7[%c0_12, %c0_13], %27 {strides = array<i32>} : memref<16x1xf32, #tpu.memory_space<vmem>>, vector<16x1xf32>,
    %c0_14 = arith.constant 0 : index
    %c0_15 = arith.constant 0 : index
    %29 = vector.load %arg8[%c0_14, %c0_15] : memref<16x1xf32, #tpu.memory_space<vmem>>, vector<16x1xf32>
    %cst_16 = arith.constant 0.000000e+00 : f32
    %30 = vector.broadcast %cst_16 : f32 to vector<16x1xf32>
    %31 = arith.select %20, %5, %30 : vector<16x1xi1>, vector<16x1xf32>
    %32 = arith.addf %29, %31 : vector<16x1xf32>
    %c0_17 = arith.constant 0 : index
    %c0_18 = arith.constant 0 : index
    %33 = vector.load %arg8[%c0_17, %c0_18] : memref<16x1xf32, #tpu.memory_space<vmem>>, vector<16x1xf32>
    tpu.vector_store %arg8[%c0_17, %c0_18], %32 {strides = array<i32>} : memref<16x1xf32, #tpu.memory_space<vmem>>, vector<16x1xf32>,
    %c0_i32_19 = arith.constant 0 : i32
    %34 = arith.cmpi eq, %arg1, %c0_i32_19 : i32
    %35 = arith.extui %34 : i1 to i32
    %c0_i32_20 = arith.constant 0 : i32
    %36 = arith.cmpi ne, %35, %c0_i32_20 : i32
    scf.if %36 {
      %c0_21 = arith.constant 0 : index
      %c0_22 = arith.constant 0 : index
      %37 = vector.load %arg7[%c0_21, %c0_22] : memref<16x1xf32, #tpu.memory_space<vmem>>, vector<16x1xf32>
      %38 = vector.shape_cast %37 : vector<16x1xf32> to vector<1x16x1xf32>
      %cst_23 = arith.constant dense<0.000000e+00> : vector<1xf32>
      %39 = vector.multi_reduction <add>, %38, %cst_23 [1, 2] : vector<1x16x1xf32> to vector<1xf32>
      %40 = vector.shape_cast %39 : vector<1xf32> to vector<1x1x1xf32>
      %41 = vector.extract %40[0, 0, 0] : f32 from vector<1x1x1xf32>
      %42 = vector.broadcast %41 : f32 to vector<1x1x1xf32>
      %c0_24 = arith.constant 0 : index
      %c0_25 = arith.constant 0 : index
      %c0_26 = arith.constant 0 : index
      %43 = vector.load %arg5[%c0_24, %c0_25, %c0_26] : memref<1x1x1xf32, #tpu.memory_space<vmem>>, vector<1x1x1xf32>
      tpu.vector_store %arg5[%c0_24, %c0_25, %c0_26], %42 {strides = array<i32>} : memref<1x1x1xf32, #tpu.memory_space<vmem>>, vector<1x1x1xf32>,
      %c0_27 = arith.constant 0 : index
      %c0_28 = arith.constant 0 : index
      %44 = vector.load %arg8[%c0_27, %c0_28] : memref<16x1xf32, #tpu.memory_space<vmem>>, vector<16x1xf32>
      %45 = vector.shape_cast %44 : vector<16x1xf32> to vector<1x16x1xf32>
      %cst_29 = arith.constant dense<0.000000e+00> : vector<1xf32>
      %46 = vector.multi_reduction <add>, %45, %cst_29 [1, 2] : vector<1x16x1xf32> to vector<1xf32>
      %47 = vector.shape_cast %46 : vector<1xf32> to vector<1x1x1xf32>
      %48 = vector.extract %47[0, 0, 0] : f32 from vector<1x1x1xf32>
      %49 = vector.broadcast %48 : f32 to vector<1x1x1xf32>
      %c0_30 = arith.constant 0 : index
      %c0_31 = arith.constant 0 : index
      %c0_32 = arith.constant 0 : index
      %50 = vector.load %arg6[%c0_30, %c0_31, %c0_32] : memref<1x1x1xf32, #tpu.memory_space<vmem>>, vector<1x1x1xf32>
      tpu.vector_store %arg6[%c0_30, %c0_31, %c0_32], %49 {strides = array<i32>} : memref<1x1x1xf32, #tpu.memory_space<vmem>>, vector<1x1x1xf32>,
    } else {
    }
    return
  }
  func.func @transform_0(%arg0: i32, %arg1: i32) -> (i32, i32) {
    %c1_i32 = arith.constant 1 : i32
    %0 = arith.muli %arg0, %c1_i32 : i32
    %1 = arith.addi %0, %arg1 : i32
    %c0_i32 = arith.constant 0 : i32
    %2 = arith.minsi %1, %c0_i32 : i32
    %c0_i32_0 = arith.constant 0 : i32
    %c0_i32_1 = arith.constant 0 : i32
    return %2, %c0_i32_0 : i32, i32
  }
  func.func @transform_1(%arg0: i32, %arg1: i32) -> (i32, i32) {
    %c1_i32 = arith.constant 1 : i32
    %0 = arith.muli %arg0, %c1_i32 : i32
    %1 = arith.addi %0, %arg1 : i32
    %c0_i32 = arith.constant 0 : i32
    %2 = arith.minsi %1, %c0_i32 : i32
    %c0_i32_0 = arith.constant 0 : i32
    %c0_i32_1 = arith.constant 0 : i32
    return %2, %c0_i32_0 : i32, i32
  }
  func.func @transform_2(%arg0: i32, %arg1: i32) -> (i32, i32) {
    %c1_i32 = arith.constant 1 : i32
    %0 = arith.muli %arg0, %c1_i32 : i32
    %1 = arith.addi %0, %arg1 : i32
    %c0_i32 = arith.constant 0 : i32
    %2 = arith.minsi %1, %c0_i32 : i32
    %c0_i32_0 = arith.constant 0 : i32
    %c0_i32_1 = arith.constant 0 : i32
    return %2, %c0_i32_0 : i32, i32
  }
  func.func @transform_3(%arg0: i32, %arg1: i32) -> (i32, i32, i32) {
    %c0_i32 = arith.constant 0 : i32
    %c0_i32_0 = arith.constant 0 : i32
    %c0_i32_1 = arith.constant 0 : i32
    return %arg0, %c0_i32, %c0_i32_0 : i32, i32, i32
  }
  func.func @transform_4(%arg0: i32, %arg1: i32) -> (i32, i32, i32) {
    %c0_i32 = arith.constant 0 : i32
    %c0_i32_0 = arith.constant 0 : i32
    %c0_i32_1 = arith.constant 0 : i32
    return %arg0, %c0_i32, %c0_i32_0 : i32, i32, i32
  }
}

</mosaic_0001>

<llo_original>
// kernel: _masked_nll_and_mask_sum.1
$region0: #{_masked_nll_and_mask_sum.1}
  #allocation0 [shape = 'u32[]', space=smem, size = 0x4, offset = 0x4, fixed_abs, tag = 'smem constant byte address 0x4 - core index']
  #allocation1 [shape = 'u32[144,128]{1,0:T(1,128)}', space=vmem, size = 0x12000, scoped, tag = 'internal scratch']
  #allocation2 [shape = 'f32[16,1]{1,0:T(8,128)}', space=vmem, size = 0x2000, scoped, tag = 'scratch operand']
  #allocation3 [shape = 'f32[16,1]{1,0:T(8,128)}', space=vmem, size = 0x2000, scoped, tag = 'scratch operand']
  %s0 = inlined_call_operand.vmem [shape: f32[16,32], index: 0, kind: input, shape index: {}]
  %s1 = inlined_call_operand.vmem [shape: s32[16,1], index: 1, kind: input, shape index: {}]
  %s2 = inlined_call_operand.vmem [shape: f32[16,1], index: 2, kind: input, shape index: {}]
  %s3 = inlined_call_operand.hbm [shape: f32[1,1,1], index: 3, kind: output, shape index: {0}]
  %s4 = inlined_call_operand.hbm [shape: f32[1,1,1], index: 4, kind: output, shape index: {1}]
  %5 = xla_tuple %s3, %s4
  %s6 = sld [smem:[#allocation0]]
  $region38: #{_masked_nll_and_mask_sum.1} parent=0
    _
  %s8 = ssub.s32 1, %s6
  %s9 = scalar_select 0, %s8, %s6
  $region1: #{_masked_nll_and_mask_sum.1} parent=0
    #allocation4 [shape = 'u8[512]{0}', space=vmem, size = 0x400, scoped, tag = 'output window, operand 0, single buffered']
    #allocation5 [shape = 's32[1]{0}', space=sflag, size = 0x4, scoped, tag = 'scoped memory for _masked_nll_and_mask_sum.1']
    #allocation6 [shape = 'u8[512]{0}', space=vmem, size = 0x400, scoped, tag = 'output window, operand 1, single buffered']
    #allocation7 [shape = 's32[1]{0}', space=sflag, size = 0x4, scoped, tag = 'scoped memory for _masked_nll_and_mask_sum.1']
    %10 = vsyncpa [#allocation5], 0
    %11 = vsyncpa [#allocation7], 0
    // Predicated region
    $region2: #{_masked_nll_and_mask_sum.1} parent=1 // pred_check
      _
    $region3: #{_masked_nll_and_mask_sum.1} parent=1 // pred_check_branch
      %13 = sbr.rel (0) target = $region5
    $region4: #{_masked_nll_and_mask_sum.1} parent=1 // pred_region
      %s14 = sadd.s32 0, 0
      %p15 = scmp.lt.s32.totalorder %s14, 0
      %s16 = scalar_select %p15, %s14, 0
      %s17 = smul.u32 2, %s16
      %p18 = scmp.lt.s32.totalorder %s17, 1
      %s19 = scalar_select %p18, %s17, 1
      %s20 = smul.addr %s19, 8
      %s21 = scalar_lea.vmem %s0, %s20
      %s22 = sadd.s32 0, 0
      %p23 = scmp.lt.s32.totalorder %s22, 0
      %s24 = scalar_select %p23, %s22, 0
      %s25 = smul.u32 2, %s24
    $region5: #{_masked_nll_and_mask_sum.1} parent=1 // pred_fallthru
      _
    // Predicated region
    $region6: #{_masked_nll_and_mask_sum.1} parent=1 // pred_check
      _
    $region7: #{_masked_nll_and_mask_sum.1} parent=1 // pred_check_branch
      %27 = sbr.rel (0) target = $region9
    $region8: #{_masked_nll_and_mask_sum.1} parent=1 // pred_region
      %s28 = sadd.s32 0, 0
      %p29 = scmp.lt.s32.totalorder %s28, 0
      %s30 = scalar_select %p29, %s28, 0
      %s31 = smul.u32 2, %s30
      %p32 = scmp.lt.s32.totalorder %s31, 1
      %s33 = scalar_select %p32, %s31, 1
      %s34 = smul.addr %s33, 8
      %s35 = scalar_lea.vmem %s1, %s34
      %s36 = sadd.s32 0, 0
      %p37 = scmp.lt.s32.totalorder %s36, 0
      %s38 = scalar_select %p37, %s36, 0
      %s39 = smul.u32 2, %s38
    $region9: #{_masked_nll_and_mask_sum.1} parent=1 // pred_fallthru
      _
    // Predicated region
    $region10: #{_masked_nll_and_mask_sum.1} parent=1 // pred_check
      _
    $region11: #{_masked_nll_and_mask_sum.1} parent=1 // pred_check_branch
      %41 = sbr.rel (0) target = $region13
    $region12: #{_masked_nll_and_mask_sum.1} parent=1 // pred_region
      %s42 = sadd.s32 0, 0
      %p43 = scmp.lt.s32.totalorder %s42, 0
      %s44 = scalar_select %p43, %s42, 0
      %s45 = smul.u32 2, %s44
      %p46 = scmp.lt.s32.totalorder %s45, 1
      %s47 = scalar_select %p46, %s45, 1
      %s48 = smul.addr %s47, 8
      %s49 = scalar_lea.vmem %s2, %s48
      %s50 = sadd.s32 0, 0
      %p51 = scmp.lt.s32.totalorder %s50, 0
      %s52 = scalar_select %p51, %s50, 0
      %s53 = smul.u32 2, %s52
    $region13: #{_masked_nll_and_mask_sum.1} parent=1 // pred_fallthru
      _
    %s54 = sadd.s32 0, 0
    %p55 = scmp.lt.s32.totalorder %s54, 0
    %s56 = scalar_select %p55, %s54, 0
    %s57 = smul.u32 2, %s56
    %p58 = scmp.lt.s32.totalorder %s57, 1
    %s59 = scalar_select %p58, %s57, 1
    %s60 = smul.addr %s59, 8
    %s61 = scalar_lea.vmem %s0, %s60
    %s62 = sadd.s32 0, 0
    %p63 = scmp.lt.s32.totalorder %s62, 0
    %s64 = scalar_select %p63, %s62, 0
    %s65 = smul.u32 2, %s64
    %p66 = scmp.lt.s32.totalorder %s65, 1
    %s67 = scalar_select %p66, %s65, 1
    %s68 = smul.addr %s67, 8
    %s69 = scalar_lea.vmem %s1, %s68
    %s70 = sadd.s32 0, 0
    %p71 = scmp.lt.s32.totalorder %s70, 0
    %s72 = scalar_select %p71, %s70, 0
    %s73 = smul.u32 2, %s72
    %p74 = scmp.lt.s32.totalorder %s73, 1
    %s75 = scalar_select %p74, %s73, 1
    %s76 = smul.addr %s75, 8
    %s77 = scalar_lea.vmem %s2, %s76
    %s78 = sadd.s32 0, 0
    %p79 = scmp.lt.s32.totalorder %s78, 0
    %s80 = scalar_select %p79, %s78, 0
    %s81 = smul.u32 2, %s80
    %p82 = scmp.lt.s32.totalorder %s81, 1
    %s83 = scalar_select %p82, %s81, 1
    %s84 = smul.addr %s83, 8
    %s85 = scalar_lea.vmem %s0, %s84
    %s86 = sadd.s32 0, 0
    %p87 = scmp.lt.s32.totalorder %s86, 0
    %s88 = scalar_select %p87, %s86, 0
    %s89 = smul.u32 2, %s88
    %s90 = sadd.s32 0, 0
    %p91 = scmp.lt.s32.totalorder %s90, 0
    %s92 = scalar_select %p91, %s90, 0
    %s93 = smul.u32 2, %s92
    %p94 = scmp.lt.s32.totalorder %s93, 1
    %s95 = scalar_select %p94, %s93, 1
    %s96 = smul.addr %s95, 8
    %s97 = scalar_lea.vmem %s1, %s96
    %s98 = sadd.s32 0, 0
    %p99 = scmp.lt.s32.totalorder %s98, 0
    %s100 = scalar_select %p99, %s98, 0
    %s101 = smul.u32 2, %s100
    %s102 = sadd.s32 0, 0
    %p103 = scmp.lt.s32.totalorder %s102, 0
    %s104 = scalar_select %p103, %s102, 0
    %s105 = smul.u32 2, %s104
    %p106 = scmp.lt.s32.totalorder %s105, 1
    %s107 = scalar_select %p106, %s105, 1
    %s108 = smul.addr %s107, 8
    %s109 = scalar_lea.vmem %s2, %s108
    %s110 = sadd.s32 0, 0
    %p111 = scmp.lt.s32.totalorder %s110, 0
    %s112 = scalar_select %p111, %s110, 0
    %s113 = smul.u32 2, %s112
    %p114 = scmp.eq.s32.totalorder 0, 0
    // Predicated region
    $region14: #{_masked_nll_and_mask_sum.1} parent=1 // pred_check
      %p115 = pneg %p114
    $region15: #{_masked_nll_and_mask_sum.1} parent=1 // pred_check_branch
      %117 = sbr.rel (%p115) target = $region17
    $region16: #{_masked_nll_and_mask_sum.1} parent=1 // pred_region
      %vm118 = vcmask 7168
      %119 = vst.msk [vmem:[#allocation2] sm:$0xff] %vm118, 0.0
      %120 = vst.msk [vmem:[#allocation2 + $0x8] sm:$0xff] %vm118, 0.0
      %121 = vst.msk [vmem:[#allocation3] sm:$0xff] %vm118, 0.0
      %122 = vst.msk [vmem:[#allocation3 + $0x8] sm:$0xff] %vm118, 0.0
    $region17: #{_masked_nll_and_mask_sum.1} parent=1 // pred_fallthru
      _
    %v123 = vld [vmem:[%s85] sm:$0xff]
    %v124 = vld [vmem:[%s85 + $0x8] sm:$0xff]
    %v125 = vld [vmem:[%s97] sm:$0xff]
    %v126 = vld [vmem:[%s97 + $0x8] sm:$0xff]
    %v127 = vld [vmem:[%s109] sm:$0xff]
    %v128 = vld [vmem:[%s109 + $0x8] sm:$0xff]
    %v129 = vlaneseq
    %v130 = vand.u32 %v129, 127
    %131 = vset.pattern.permute.xlu0 0
    %132 = vperm.xlu0 %131, %v125
    %v133 = vpop.permute.xlu0 %132
    %134 = vset.pattern.permute.xlu0 0
    %135 = vperm.xlu0 %134, %v126
    %v136 = vpop.permute.xlu0 %135
    %vm137 = vcmp.eq.s32.totalorder %v130, %v133
    %vm138 = vcmp.eq.s32.totalorder %v130, %v136
    %v139 = vsel %vm137, %v123, 0.0
    %v140 = vsel %vm138, %v124, 0.0
    %vm141 = vcmask 261120
    %v142 = vsel %vm141, %v139, 0.0
    %143 = vadd.xlane.f32.xlu0 %v142
    %v144 = vpop.xlane.xlu0 %143
    %v145 = vsel %vm141, %v140, 0.0
    %146 = vadd.xlane.f32.xlu0 %v145
    %v147 = vpop.xlane.xlu0 %146
    %s148 = sadd.s32 0, 0
    %s149 = smul.u32 %s148, 16
    %v150 = vlaneseq
    %v151 = vshrl.u32 %v150, 7
    %v152 = vadd.s32 %v151, 8
    %v153 = vstv %s149
    %v154 = vadd.s32 %v153, %v151
    %v155 = vadd.s32 %v153, %v152
    %vm156 = vcmp.lt.s32.totalorder %v154, 16
    %vm157 = vcmp.lt.s32.totalorder %v155, 16
    %v158 = vld [vmem:[#allocation2] sm:$0xff]
    %v159 = vld [vmem:[#allocation2 + $0x8] sm:$0xff]
    %v160 = vsub.f32 0.0, %v144
    %v161 = vsub.f32 0.0, %v147
    %v162 = vmul.f32 %v160, %v127
    %v163 = vmul.f32 %v161, %v128
    %v164 = vsel %vm156, %v162, 0.0
    %v165 = vsel %vm157, %v163, 0.0
    %v166 = vadd.f32 %v158, %v164
    %v167 = vadd.f32 %v159, %v165
    %vm168 = vcmask 7168
    %169 = vst.msk [vmem:[#allocation2] sm:$0xff] %vm168, %v166
    %170 = vst.msk [vmem:[#allocation2 + $0x8] sm:$0xff] %vm168, %v167
    %v171 = vld [vmem:[#allocation3] sm:$0xff]
    %v172 = vld [vmem:[#allocation3 + $0x8] sm:$0xff]
    %v173 = vsel %vm156, %v127, 0.0
    %v174 = vsel %vm157, %v128, 0.0
    %v175 = vadd.f32 %v171, %v173
    %v176 = vadd.f32 %v172, %v174
    %177 = vst.msk [vmem:[#allocation3] sm:$0xff] %vm168, %v175
    %178 = vst.msk [vmem:[#allocation3 + $0x8] sm:$0xff] %vm168, %v176
    // Predicated region
    $region18: #{_masked_nll_and_mask_sum.1} parent=1 // pred_check
      %p179 = pneg %p114
    $region19: #{_masked_nll_and_mask_sum.1} parent=1 // pred_check_branch
      %181 = sbr.rel (%p179) target = $region21
    $region20: #{_masked_nll_and_mask_sum.1} parent=1 // pred_region
      %v182 = vld [vmem:[#allocation2] sm:$0xff]
      %v183 = vld [vmem:[#allocation2 + $0x8] sm:$0xff]
      %v184 = vsel %vm168, %v182, 0.0
      %v185 = vsel %vm168, %v183, 0.0
      %v186 = vadd.f32 %v184, %v185
      %187 = vadd.xlane.f32.xlu0 %v186
      %v188 = vpop.xlane.xlu0 %187
      %v189 = vrot.slane %v188, 4
      %v190 = vadd.f32 %v188, %v189
      %v191 = vrot.slane %v190, 2
      %v192 = vadd.f32 %v190, %v191
      %v193 = vrot.slane %v192, 1
      %v194 = vadd.f32 %v192, %v193
      %s195 = vtos %v194
      %v196 = vstv %s195
      %vm197 = vcmask 0
      %198 = vst.msk [vmem:[#allocation4] sm:$0x1] %vm197, %v196
      %v199 = vld [vmem:[#allocation3] sm:$0xff]
      %v200 = vld [vmem:[#allocation3 + $0x8] sm:$0xff]
      %v201 = vsel %vm168, %v199, 0.0
      %v202 = vsel %vm168, %v200, 0.0
      %v203 = vadd.f32 %v201, %v202
      %204 = vadd.xlane.f32.xlu0 %v203
      %v205 = vpop.xlane.xlu0 %204
      %v206 = vrot.slane %v205, 4
      %v207 = vadd.f32 %v205, %v206
      %v208 = vrot.slane %v207, 2
      %v209 = vadd.f32 %v207, %v208
      %v210 = vrot.slane %v209, 1
      %v211 = vadd.f32 %v209, %v210
      %s212 = vtos %v211
      %v213 = vstv %s212
      %214 = vst.msk [vmem:[#allocation6] sm:$0x1] %vm197, %v213
    $region21: #{_masked_nll_and_mask_sum.1} parent=1 // pred_fallthru
      _
    // Predicated region
    $region22: #{_masked_nll_and_mask_sum.1} parent=1 // pred_check
      _
    $region23: #{_masked_nll_and_mask_sum.1} parent=1 // pred_check_branch
      %216 = sbr.rel (0) target = $region25
    $region24: #{_masked_nll_and_mask_sum.1} parent=1 // pred_region
      %s218 = ssub.s32 16, 16
      %219 = vsyncadd [#allocation5], %s218
      %s221 = sshll.u32 [#allocation4], 4
      %s222 = int_to_ptr.vmem [resolvable:$true] %s221
      %224 = dma.vmem_to_hbm [thread:$0]  %s222, 16, %s3, [#allocation5]
    $region25: #{_masked_nll_and_mask_sum.1} parent=1 // pred_fallthru
      _
    // Predicated region
    $region26: #{_masked_nll_and_mask_sum.1} parent=1 // pred_check
      _
    $region27: #{_masked_nll_and_mask_sum.1} parent=1 // pred_check_branch
      %226 = sbr.rel (0) target = $region29
    $region28: #{_masked_nll_and_mask_sum.1} parent=1 // pred_region
      %s228 = ssub.s32 16, 16
      %229 = vsyncadd [#allocation7], %s228
      %s231 = sshll.u32 [#allocation6], 4
      %s232 = int_to_ptr.vmem [resolvable:$true] %s231
      %234 = dma.vmem_to_hbm [thread:$0]  %s232, 16, %s4, [#allocation7]
    $region29: #{_masked_nll_and_mask_sum.1} parent=1 // pred_fallthru
      _
    // Predicated region
    $region30: #{_masked_nll_and_mask_sum.1} parent=1 // pred_check
      _
    $region31: #{_masked_nll_and_mask_sum.1} parent=1 // pred_check_branch
      %236 = sbr.rel (0) target = $region33
    $region32: #{_masked_nll_and_mask_sum.1} parent=1 // pred_region
      %237 = dma.done [#allocation5], 16
    $region33: #{_masked_nll_and_mask_sum.1} parent=1 // pred_fallthru
      _
    // Predicated region
    $region34: #{_masked_nll_and_mask_sum.1} parent=1 // pred_check
      _
    $region35: #{_masked_nll_and_mask_sum.1} parent=1 // pred_check_branch
      %239 = sbr.rel (0) target = $region37
    $region36: #{_masked_nll_and_mask_sum.1} parent=1 // pred_region
      %240 = dma.done [#allocation7], 16
    $region37: #{_masked_nll_and_mask_sum.1} parent=1 // pred_fallthru
      _
    %241 = vsyncpa [#allocation5], 1
    %242 = vsyncpa [#allocation7], 1

</llo_original>
